<compile_context>
chip_gen: v7x
topology: tpu7x:2x2x1
jax: 0.10.0
libtpu: 0.0.40
codegen_flags: <defaults>
</compile_context>

<pallas_src>
import functools

import jax
import jax.numpy as jnp
from jax.experimental import pallas as pl
from jax.experimental.pallas import tpu as pltpu

_LANE = 128
_TARGET_BLOCK_BYTES = 4 * 1024 * 1024   # combined (x + t) bytes per grid step


def _sublane_align(dtype):
    # f32 tiles as (8,128); packed dtypes need 16 (bf16/f16) / 32 (int8) rows.
    return max(8, 32 // jnp.dtype(dtype).itemsize)


def _canon(a):
    a = jnp.asarray(a)
    if a.dtype in (jnp.float32, jnp.bfloat16, jnp.float16, jnp.int8, jnp.uint8):
        return a                       # narrow dtypes pass through untouched
    return a.astype(jnp.float32)       # bool / int32 / f64 etc.


def _dice_kernel(x_ref, t_ref, out_ref, *, n_valid, needs_mask):
    """Grid = (core-splits, row-blocks-per-split).

    out_ref (resident block, (1, 2, 8, 128) f32) accumulates per-split
    vector partials:
      out[0, 0] = sum over valid elems of sigmoid(x) * t   (intersection)
      out[0, 1] = sum over valid elems of sigmoid(x) + t   (fused denominator)
    The scalar reduction + dice math happen in the JAX wrapper.
    """
    c = pl.program_id(0)
    i = pl.program_id(1)
    nb_per_split = pl.num_programs(1)
    block_rows = x_ref.shape[0]

    @pl.when(i == 0)
    def _init():
        out_ref[...] = jnp.zeros_like(out_ref)

    x = x_ref[...].astype(jnp.float32)
    t = t_ref[...].astype(jnp.float32)
    s = jax.nn.sigmoid(x)              # EUP transcendental

    st = s * t                         # intersection terms
    spt = s + t                        # fused sum(s) + sum(t) terms

    if needs_mask:
        # Mask anything past the true element count: covers the 128-alignment
        # tail pad, a partial last block, and the fully-clamped duplicate
        # block of an odd 2-way split.  Compare a block-local element index
        # against a scalar "remaining" count (cheaper than a global iota).
        blk = c * nb_per_split + i
        row = jax.lax.broadcasted_iota(jnp.int32, (block_rows, _LANE), 0)
        col = jax.lax.broadcasted_iota(jnp.int32, (block_rows, _LANE), 1)
        local = row * _LANE + col
        remaining = n_valid - blk * (block_rows * _LANE)   # scalar
        mask = local < remaining
        st = jnp.where(mask, st, 0.0)
        spt = jnp.where(mask, spt, 0.0)

    # Reduce the block to one (8, 128) vreg per quantity: the reshape is
    # layout-free and the axis-0 sum is plain vreg adds (VPU), so it co-issues
    # under the DMA; no per-tile XLU/scalar reductions.
    g = block_rows // 8
    out_ref[0, 0] += st.reshape(g, 8, _LANE).sum(axis=0)
    out_ref[0, 1] += spt.reshape(g, 8, _LANE).sum(axis=0)


def dice_loss(inputs, targets, smooth=1.0):
    """JAX wrapper reproducing DiceLoss.forward(inputs, targets, smooth)."""
    x = _canon(inputs)
    t = _canon(targets)

    n = x.size                     # true element count (static Python int)
    x = x.reshape(-1)
    t = t.reshape(-1)

    # Pad only to a sublane-aligned multiple of 128 (a no-op for typical UNet
    # shapes).  Padded / duplicated values are masked out in-kernel.
    align = max(_sublane_align(x.dtype), _sublane_align(t.dtype))
    pad = (-n) % (align * _LANE)
    if pad:
        x = jnp.pad(x, (0, pad))
        t = jnp.pad(t, (0, pad))
    rows = (n + pad) // _LANE
    x2 = x.reshape(rows, _LANE)    # free, lane-dense view
    t2 = t.reshape(rows, _LANE)

    # Block rows sized by bytes so per-step DMA stays large but total VMEM
    # (2 inputs x 2 pipeline buffers) stays ~8 MiB.
    bytes_per_row = _LANE * (x2.dtype.itemsize + t2.dtype.itemsize)
    max_rows = max(align, (_TARGET_BLOCK_BYTES // bytes_per_row) // align * align)
    block_rows = min(max_rows, rows)           # multiple of `align` (>= 8)
    nb = pl.cdiv(rows, block_rows)             # total row-blocks
    n_splits = 2 if nb >= 2 else 1             # 2-way core split when useful
    nb_split = pl.cdiv(nb, n_splits)           # blocks per core-split

    # Emit the masking code only when statically required.
    needs_mask = (pad != 0) or (rows % block_rows != 0) or (nb_split * n_splits != nb)

    def in_idx(c, i):
        # Clamp so the index map never points past the array; the over-range
        # duplicate iteration of the second split is fully masked in-kernel.
        return (jnp.minimum(c * nb_split + i, nb - 1), 0)

    kernel = functools.partial(_dice_kernel, n_valid=n, needs_mask=needs_mask)

    partials = pl.pallas_call(
        kernel,
        out_shape=jax.ShapeDtypeStruct((n_splits, 2, 8, _LANE), jnp.float32),
        grid_spec=pltpu.PrefetchScalarGridSpec(
            num_scalar_prefetch=0,
            grid=(n_splits, nb_split),
            in_specs=[
                pl.BlockSpec((block_rows, _LANE), in_idx),
                pl.BlockSpec((block_rows, _LANE), in_idx),
            ],
            out_specs=pl.BlockSpec((1, 2, 8, _LANE), lambda c, i: (c, 0, 0, 0)),
        ),
        compiler_params=pltpu.CompilerParams(
            dimension_semantics=("parallel", "arbitrary"),
            vmem_limit_bytes=32 * 1024 * 1024),
    )(x2, t2)

    # Final cross-lane reductions + dice arithmetic outside the kernel (keeps
    # `smooth` out of the compiled kernel; trivial cost).
    inter = jnp.sum(partials[:, 0])
    denom = jnp.sum(partials[:, 1])          # sum(sigmoid(x)) + sum(t)
    smooth = jnp.float32(smooth)
    return 1.0 - (2.0 * inter + smooth) / (denom + smooth)


def dice_loss_ref(inputs, targets, smooth=1.0):
    """Pure-JAX reference matching the PyTorch module exactly."""
    x = jax.nn.sigmoid(jnp.asarray(inputs, jnp.float32).reshape(-1))
    t = jnp.asarray(targets, jnp.float32).reshape(-1)
    inter = jnp.sum(x * t)
    dice = (2.0 * inter + smooth) / (jnp.sum(x) + jnp.sum(t) + smooth)
    return 1.0 - dice


if __name__ == "__main__":
    key = jax.random.PRNGKey(0)
    k_in, k_tg = jax.random.split(key)

    # Small UNet-style logits / binary masks: (B, C, H, W) = (2, 4, 16, 16)
    inputs = jax.random.normal(k_in, (2, 4, 16, 16), dtype=jnp.float32)
    targets = (jax.random.uniform(k_tg, (2, 4, 16, 16)) > 0.5).astype(
        jnp.float32)

    loss = dice_loss(inputs, targets, smooth=1.0)
    loss = jax.block_until_ready(loss)

    ref = dice_loss_ref(inputs, targets, smooth=1.0)
    assert jnp.allclose(loss, ref, rtol=1e-5, atol=1e-5), (loss, ref)

    print("KERNEL_OK")
</pallas_src>

<mosaic_0001>
module attributes {stable_mosaic.version = 11 : i64} {
  func.func @_dice_kernel(%arg0: i32, %arg1: i32, %arg2: memref<16x128xf32, #tpu.memory_space<vmem>>, %arg3: memref<16x128xf32, #tpu.memory_space<vmem>>, %arg4: memref<1x2x8x128xf32, #tpu.memory_space<vmem>>) attributes {dimension_semantics = [#tpu.dimension_semantics<parallel>, #tpu.dimension_semantics<arbitrary>], iteration_bounds = array<i64: 1, 1>, scalar_prefetch = 0 : i64, scratch_operands = 0 : i64, tpu.core_type = #tpu.core_type<tc>, window_params = [{transform_indices = @transform_0, window_bounds = array<i64: 16, 128>}, {transform_indices = @transform_1, window_bounds = array<i64: 16, 128>}, {transform_indices = @transform_2, window_bounds = array<i64: 1, 2, 8, 128>}]} {
    %c0_i32 = arith.constant 0 : i32
    %0 = arith.cmpi eq, %arg1, %c0_i32 : i32
    %1 = arith.extui %0 : i1 to i32
    %c0_i32_0 = arith.constant 0 : i32
    %2 = arith.cmpi ne, %1, %c0_i32_0 : i32
    scf.if %2 {
      %cst_21 = arith.constant 0.000000e+00 : f32
      %28 = vector.broadcast %cst_21 : f32 to vector<1x2x8x128xf32>
      %c0_22 = arith.constant 0 : index
      %c0_23 = arith.constant 0 : index
      %c0_24 = arith.constant 0 : index
      %c0_25 = arith.constant 0 : index
      %29 = vector.load %arg4[%c0_22, %c0_23, %c0_24, %c0_25] : memref<1x2x8x128xf32, #tpu.memory_space<vmem>>, vector<1x2x8x128xf32>
      tpu.vector_store %arg4[%c0_22, %c0_23, %c0_24, %c0_25], %28 {strides = array<i32>} : memref<1x2x8x128xf32, #tpu.memory_space<vmem>>, vector<1x2x8x128xf32>,
    } else {
    }
    %c0 = arith.constant 0 : index
    %c0_1 = arith.constant 0 : index
    %3 = vector.load %arg2[%c0, %c0_1] : memref<16x128xf32, #tpu.memory_space<vmem>>, vector<16x128xf32>
    %c0_2 = arith.constant 0 : index
    %c0_3 = arith.constant 0 : index
    %4 = vector.load %arg3[%c0_2, %c0_3] : memref<16x128xf32, #tpu.memory_space<vmem>>, vector<16x128xf32>
    %5 = arith.negf %3 : vector<16x128xf32>
    %6 = math.exp %5 : vector<16x128xf32>
    %cst = arith.constant 1.000000e+00 : f32
    %7 = vector.broadcast %cst : f32 to vector<16x128xf32>
    %8 = arith.addf %7, %6 : vector<16x128xf32>
    %9 = arith.divf %7, %8 : vector<16x128xf32>
    %10 = arith.mulf %9, %4 : vector<16x128xf32>
    %11 = arith.addf %9, %4 : vector<16x128xf32>
    %c0_4 = arith.constant 0 : index
    %c0_5 = arith.constant 0 : index
    %c0_6 = arith.constant 0 : index
    %c0_7 = arith.constant 0 : index
    %12 = vector.load %arg4[%c0_4, %c0_5, %c0_6, %c0_7] : memref<1x2x8x128xf32, #tpu.memory_space<vmem>>, vector<1x1x8x128xf32>
    %13 = vector.shape_cast %12 : vector<1x1x8x128xf32> to vector<8x128xf32>
    %14 = vector.shape_cast %10 : vector<16x128xf32> to vector<2x8x128xf32>
    %cst_8 = arith.constant dense<0.000000e+00> : vector<8x128xf32>
    %15 = vector.multi_reduction <add>, %14, %cst_8 [0] : vector<2x8x128xf32> to vector<8x128xf32>
    %16 = arith.addf %13, %15 : vector<8x128xf32>
    %c0_9 = arith.constant 0 : index
    %c0_10 = arith.constant 0 : index
    %c0_11 = arith.constant 0 : index
    %c0_12 = arith.constant 0 : index
    %17 = vector.load %arg4[%c0_9, %c0_10, %c0_11, %c0_12] : memref<1x2x8x128xf32, #tpu.memory_space<vmem>>, vector<1x1x8x128xf32>
    %18 = vector.shape_cast %17 : vector<1x1x8x128xf32> to vector<8x128xf32>
    %19 = vector.shape_cast %16 : vector<8x128xf32> to vector<1x1x8x128xf32>
    tpu.vector_store %arg4[%c0_9, %c0_10, %c0_11, %c0_12], %19 {strides = array<i32>} : memref<1x2x8x128xf32, #tpu.memory_space<vmem>>, vector<1x1x8x128xf32>,
    %c0_13 = arith.constant 0 : index
    %c1 = arith.constant 1 : index
    %c0_14 = arith.constant 0 : index
    %c0_15 = arith.constant 0 : index
    %20 = vector.load %arg4[%c0_13, %c1, %c0_14, %c0_15] : memref<1x2x8x128xf32, #tpu.memory_space<vmem>>, vector<1x1x8x128xf32>
    %21 = vector.shape_cast %20 : vector<1x1x8x128xf32> to vector<8x128xf32>
    %22 = vector.shape_cast %11 : vector<16x128xf32> to vector<2x8x128xf32>
    %cst_16 = arith.constant dense<0.000000e+00> : vector<8x128xf32>
    %23 = vector.multi_reduction <add>, %22, %cst_16 [0] : vector<2x8x128xf32> to vector<8x128xf32>
    %24 = arith.addf %21, %23 : vector<8x128xf32>
    %c0_17 = arith.constant 0 : index
    %c1_18 = arith.constant 1 : index
    %c0_19 = arith.constant 0 : index
    %c0_20 = arith.constant 0 : index
    %25 = vector.load %arg4[%c0_17, %c1_18, %c0_19, %c0_20] : memref<1x2x8x128xf32, #tpu.memory_space<vmem>>, vector<1x1x8x128xf32>
    %26 = vector.shape_cast %25 : vector<1x1x8x128xf32> to vector<8x128xf32>
    %27 = vector.shape_cast %24 : vector<8x128xf32> to vector<1x1x8x128xf32>
    tpu.vector_store %arg4[%c0_17, %c1_18, %c0_19, %c0_20], %27 {strides = array<i32>} : memref<1x2x8x128xf32, #tpu.memory_space<vmem>>, vector<1x1x8x128xf32>,
    return
  }
  func.func @transform_0(%arg0: i32, %arg1: i32) -> (i32, i32) {
    %c1_i32 = arith.constant 1 : i32
    %0 = arith.muli %arg0, %c1_i32 : i32
    %1 = arith.addi %0, %arg1 : i32
    %c0_i32 = arith.constant 0 : i32
    %2 = arith.minsi %1, %c0_i32 : i32
    %c0_i32_0 = arith.constant 0 : i32
    %c0_i32_1 = arith.constant 0 : i32
    return %2, %c0_i32_0 : i32, i32
  }
  func.func @transform_1(%arg0: i32, %arg1: i32) -> (i32, i32) {
    %c1_i32 = arith.constant 1 : i32
    %0 = arith.muli %arg0, %c1_i32 : i32
    %1 = arith.addi %0, %arg1 : i32
    %c0_i32 = arith.constant 0 : i32
    %2 = arith.minsi %1, %c0_i32 : i32
    %c0_i32_0 = arith.constant 0 : i32
    %c0_i32_1 = arith.constant 0 : i32
    return %2, %c0_i32_0 : i32, i32
  }
  func.func @transform_2(%arg0: i32, %arg1: i32) -> (i32, i32, i32, i32) {
    %c0_i32 = arith.constant 0 : i32
    %c0_i32_0 = arith.constant 0 : i32
    %c0_i32_1 = arith.constant 0 : i32
    %c0_i32_2 = arith.constant 0 : i32
    return %arg0, %c0_i32, %c0_i32_0, %c0_i32_1 : i32, i32, i32, i32
  }
}

</mosaic_0001>

<llo_original>
// kernel: tpu_custom_call.1
$region0: #{tpu_custom_call.1}
  #allocation0 [shape = 'u32[]', space=smem, size = 0x4, offset = 0x4, fixed_abs, tag = 'smem constant byte address 0x4 - core index']
  #allocation1 [shape = 'u32[144,128]{1,0:T(1,128)}', space=vmem, size = 0x12000, scoped, tag = 'internal scratch']
  %s0 = inlined_call_operand.hbm [shape: f32[16,128], index: 0, kind: input, shape index: {}]
  %s1 = inlined_call_operand.hbm [shape: f32[16,128], index: 1, kind: input, shape index: {}]
  %s2 = inlined_call_operand.hbm [shape: f32[1,2,8,128], index: 2, kind: output, shape index: {}]
  %s3 = sld [smem:[#allocation0]]
  $region30: #{tpu_custom_call.1} parent=0
    _
  %s5 = ssub.s32 1, %s3
  %s6 = scalar_select 0, %s5, %s3
  $region1: #{tpu_custom_call.1} parent=0
    #allocation2 [shape = 'u8[8192]{0}', space=vmem, size = 0x2000, scoped, tag = 'input window, operand 0, single buffered']
    #allocation3 [shape = 's32[1]{0}', space=sflag, size = 0x4, scoped, tag = 'scoped memory for tpu_custom_call.1']
    #allocation4 [shape = 's32[1]{0}', space=sflag, size = 0x4, scoped, tag = 'scoped memory for tpu_custom_call.1']
    #allocation5 [shape = 'u8[8192]{0}', space=vmem, size = 0x2000, scoped, tag = 'input window, operand 1, single buffered']
    #allocation6 [shape = 's32[1]{0}', space=sflag, size = 0x4, scoped, tag = 'scoped memory for tpu_custom_call.1']
    #allocation7 [shape = 'u8[8192]{0}', space=vmem, size = 0x2000, scoped, tag = 'output window, operand 0, single buffered']
    %7 = vsyncpa [#allocation3], 0
    %8 = vsyncpa [#allocation6], 0
    %9 = vsyncpa [#allocation4], 0
    // Predicated region
    $region2: #{tpu_custom_call.1} parent=1 // pred_check
      _
    $region3: #{tpu_custom_call.1} parent=1 // pred_check_branch
      %11 = sbr.rel (0) target = $region5
    $region4: #{tpu_custom_call.1} parent=1 // pred_region
      %s12 = sadd.s32 0, 0
      %p13 = scmp.lt.s32.totalorder %s12, 0
      %s14 = scalar_select %p13, %s12, 0
      %s15 = smul.u32 2, %s14
      %s17 = ssub.s32 256, 256
      %18 = vsyncadd [#allocation3], %s17
      %s19 = smul.addr %s15, 128
      %s20 = scalar_lea.hbm %s0, %s19
      %s21 = sshll.u32 [#allocation2], 4
      %s22 = int_to_ptr.vmem [resolvable:$true] %s21
      %27 = dma.hbm_to_vmem [thread:$0]  %s20, 256, %s22, [#allocation3], 128, 128, 8
    $region5: #{tpu_custom_call.1} parent=1 // pred_fallthru
      _
    // Predicated region
    $region6: #{tpu_custom_call.1} parent=1 // pred_check
      _
    $region7: #{tpu_custom_call.1} parent=1 // pred_check_branch
      %29 = sbr.rel (0) target = $region9
    $region8: #{tpu_custom_call.1} parent=1 // pred_region
      %s30 = sadd.s32 0, 0
      %p31 = scmp.lt.s32.totalorder %s30, 0
      %s32 = scalar_select %p31, %s30, 0
      %s33 = smul.u32 2, %s32
      %s35 = ssub.s32 256, 256
      %36 = vsyncadd [#allocation6], %s35
      %s37 = smul.addr %s33, 128
      %s38 = scalar_lea.hbm %s1, %s37
      %s39 = sshll.u32 [#allocation5], 4
      %s40 = int_to_ptr.vmem [resolvable:$true] %s39
      %45 = dma.hbm_to_vmem [thread:$0]  %s38, 256, %s40, [#allocation6], 128, 128, 8
    $region9: #{tpu_custom_call.1} parent=1 // pred_fallthru
      _
    // Predicated region
    $region10: #{tpu_custom_call.1} parent=1 // pred_check
      _
    $region11: #{tpu_custom_call.1} parent=1 // pred_check_branch
      %47 = sbr.rel (0) target = $region13
    $region12: #{tpu_custom_call.1} parent=1 // pred_region
      %48 = dma.done [#allocation3], 256
    $region13: #{tpu_custom_call.1} parent=1 // pred_fallthru
      _
    // Predicated region
    $region14: #{tpu_custom_call.1} parent=1 // pred_check
      _
    $region15: #{tpu_custom_call.1} parent=1 // pred_check_branch
      %50 = sbr.rel (0) target = $region17
    $region16: #{tpu_custom_call.1} parent=1 // pred_region
      %51 = dma.done [#allocation6], 256
    $region17: #{tpu_custom_call.1} parent=1 // pred_fallthru
      _
    %s52 = sadd.s32 0, 0
    %p53 = scmp.lt.s32.totalorder %s52, 0
    %s54 = scalar_select %p53, %s52, 0
    %s55 = smul.u32 2, %s54
    %s56 = sadd.s32 0, 0
    %p57 = scmp.lt.s32.totalorder %s56, 0
    %s58 = scalar_select %p57, %s56, 0
    %s59 = smul.u32 2, %s58
    %p60 = scmp.eq.s32.totalorder 0, 0
    // Predicated region
    $region18: #{tpu_custom_call.1} parent=1 // pred_check
      %p61 = pneg %p60
    $region19: #{tpu_custom_call.1} parent=1 // pred_check_branch
      %63 = sbr.rel (%p61) target = $region21
    $region20: #{tpu_custom_call.1} parent=1 // pred_region
      %64 = vst [vmem:[#allocation7] sm:$0xff] 0.0
      %65 = vst [vmem:[#allocation7 + $0x8] sm:$0xff] 0.0
    $region21: #{tpu_custom_call.1} parent=1 // pred_fallthru
      _
    %v66 = vld [vmem:[#allocation2] sm:$0xff]
    %v67 = vld [vmem:[#allocation2 + $0x8] sm:$0xff]
    %v68 = vld [vmem:[#allocation5] sm:$0xff]
    %v69 = vld [vmem:[#allocation5 + $0x8] sm:$0xff]
    %v70 = vxor.u32 %v66, 2147483648
    %v71 = vxor.u32 %v67, 2147483648
    %v72 = vmul.f32 %v70, 1.442695
    %v73 = vpow.pop %v72
    %v74 = vmul.f32 %v71, 1.442695
    %v75 = vpow.pop %v74
    %v76 = vadd.f32 %v73, 1.0
    %v77 = vadd.f32 %v75, 1.0
    %v78 = vrcp.pop %v76
    %v79 = vmul.f32 1.0, %v78
    %v80 = vrcp.pop %v77
    %v81 = vmul.f32 1.0, %v80
    %v82 = vmul.f32 %v79, %v68
    %v83 = vmul.f32 %v81, %v69
    %v84 = vadd.f32 %v79, %v68
    %v85 = vadd.f32 %v81, %v69
    %v86 = vld [vmem:[#allocation7] sm:$0xff]
    %v87 = vadd.f32 %v82, %v83
    %v88 = vadd.f32 %v86, %v87
    %89 = vst [vmem:[#allocation7] sm:$0xff] %v88
    %s90 = scalar_lea.vmem [#allocation7], 8
    %v91 = vld [vmem:[%s90] sm:$0xff]
    %v92 = vadd.f32 %v84, %v85
    %v93 = vadd.f32 %v91, %v92
    %94 = vst [vmem:[%s90] sm:$0xff] %v93
    // Predicated region
    $region22: #{tpu_custom_call.1} parent=1 // pred_check
      _
    $region23: #{tpu_custom_call.1} parent=1 // pred_check_branch
      %96 = sbr.rel (0) target = $region25
    $region24: #{tpu_custom_call.1} parent=1 // pred_region
      %s98 = ssub.s32 256, 256
      %99 = vsyncadd [#allocation4], %s98
      %s100 = sshll.u32 [#allocation7], 4
      %s101 = int_to_ptr.vmem [resolvable:$true] %s100
      %106 = dma.vmem_to_hbm [thread:$0]  %s101, 256, %s2, [#allocation4], 128, 128, 8
    $region25: #{tpu_custom_call.1} parent=1 // pred_fallthru
      _
    // Predicated region
    $region26: #{tpu_custom_call.1} parent=1 // pred_check
      _
    $region27: #{tpu_custom_call.1} parent=1 // pred_check_branch
      %108 = sbr.rel (0) target = $region29
    $region28: #{tpu_custom_call.1} parent=1 // pred_region
      %109 = dma.done [#allocation4], 256
    $region29: #{tpu_custom_call.1} parent=1 // pred_fallthru
      _
    %110 = vsyncpa [#allocation3], 1
    %111 = vsyncpa [#allocation6], 1
    %112 = vsyncpa [#allocation4], 1

</llo_original>
